<compile_context>
chip_gen: v5e
topology: v5e:2x2
jax: 0.10.0
libtpu: 0.0.40
codegen_flags: <defaults>
</compile_context>

<pallas_src>
import jax
import jax.numpy as jnp
from jax.experimental import pallas as pl
from jax.experimental.pallas import tpu as pltpu


def _round_up(x: int, m: int) -> int:
    return ((x + m - 1) // m) * m


def relation_encoder_kernel(x_ref, w1_ref, b1_ref, w2_ref, b2_ref, o_ref):
    # First linear + ReLU: MXU matmul with f32 accumulation, bias/ReLU on the VPU in f32.
    h = jnp.dot(x_ref[...], w1_ref[...], preferred_element_type=jnp.float32)
    h = jnp.maximum(h + b1_ref[...], 0.0)          # b1 is (1, hidden_p) f32 -> row broadcast
    # Second linear + ReLU: cast activations to the weight dtype only for the matmul.
    y = jnp.dot(h.astype(w2_ref.dtype), w2_ref[...], preferred_element_type=jnp.float32)
    y = jnp.maximum(y + b2_ref[...], 0.0)          # b2 is (1, d_out_p) f32 -> row broadcast
    o_ref[...] = y.astype(o_ref.dtype)


def relation_encoder(x, w1, b1, w2, b2, *, row_tile=512, lane=128,
                     vmem_budget_bytes=48 * 1024 * 1024):
    """x: [N, d_in]; w1: [d_in, hidden]; b1: [hidden]; w2: [hidden, d_out]; b2: [d_out].
    Returns [N, d_out] with dtype of x.  Biases are kept/accumulated in f32."""
    n, d_in = x.shape
    d_in_w, hidden = w1.shape
    hidden_w, d_out = w2.shape
    assert d_in == d_in_w and hidden == hidden_w

    # ---- Lane-dense padding of feature dims (zero padding is exact for this MLP). ----
    d_in_p = _round_up(d_in, lane)
    hid_p = _round_up(hidden, lane)
    d_out_p = _round_up(d_out, lane)

    x_p = jnp.pad(x, ((0, 0), (0, d_in_p - d_in)))
    w1_p = jnp.pad(w1, ((0, d_in_p - d_in), (0, hid_p - hidden)))
    b1_p = jnp.pad(b1.astype(jnp.float32), (0, hid_p - hidden)).reshape(1, hid_p)
    w2_p = jnp.pad(w2, ((0, hid_p - hidden), (0, d_out_p - d_out)))
    b2_p = jnp.pad(b2.astype(jnp.float32), (0, d_out_p - d_out)).reshape(1, d_out_p)

    act_item = jnp.dtype(x.dtype).itemsize
    w_item = jnp.dtype(w1.dtype).itemsize

    # ---- Row tile: big, multiple of 8, clamped to padded N and to the VMEM budget. ----
    row_tile = _round_up(max(8, min(row_tile, _round_up(n, 8))), 8)

    def _vmem_footprint(rt):
        io = 2 * rt * (d_in_p + d_out_p) * act_item          # double-buffered x / out tiles
        wts = 2 * (d_in_p * hid_p + hid_p * d_out_p) * w_item  # resident weights (2 bufs)
        wts += 2 * (hid_p + d_out_p) * 4                       # biases (f32)
        inter = rt * (hid_p + d_out_p) * 4                     # f32 intermediates
        return io + wts + inter

    while row_tile > 8 and _vmem_footprint(row_tile) > vmem_budget_bytes:
        row_tile = max(8, _round_up(row_tile // 2, 8))

    n_pad = _round_up(n, row_tile)
    x_p = jnp.pad(x_p, ((0, n_pad - n), (0, 0)))
    grid = (n_pad // row_tile,)

    flops = 2 * n_pad * d_in_p * hid_p + 2 * n_pad * hid_p * d_out_p
    bytes_accessed = (n_pad * d_in_p * act_item
                      + (d_in_p * hid_p + hid_p * d_out_p) * w_item
                      + (hid_p + d_out_p) * 4
                      + n_pad * d_out_p * act_item)

    out_p = pl.pallas_call(
        relation_encoder_kernel,
        out_shape=jax.ShapeDtypeStruct((n_pad, d_out_p), x.dtype),
        grid_spec=pltpu.PrefetchScalarGridSpec(
            num_scalar_prefetch=0,
            grid=grid,
            in_specs=[
                # x: tile over the n_relations axis, full (padded) feature width.
                pl.BlockSpec((row_tile, d_in_p), lambda i: (i, 0)),
                # Weights / biases: full arrays, grid-invariant (resident across steps).
                pl.BlockSpec((d_in_p, hid_p), lambda i: (0, 0)),
                pl.BlockSpec((1, hid_p), lambda i: (0, 0)),
                pl.BlockSpec((hid_p, d_out_p), lambda i: (0, 0)),
                pl.BlockSpec((1, d_out_p), lambda i: (0, 0)),
            ],
            out_specs=pl.BlockSpec((row_tile, d_out_p), lambda i: (i, 0)),
        ),
        compiler_params=pltpu.CompilerParams(
            dimension_semantics=("parallel",),
            vmem_limit_bytes=vmem_budget_bytes,
        ),
        cost_estimate=pl.CostEstimate(
            flops=int(flops), transcendentals=0, bytes_accessed=int(bytes_accessed)),
    )(x_p, w1_p, b1_p, w2_p, b2_p)

    # Strip row / lane padding back to the logical output shape.
    return out_p[:n, :d_out]


def init_params(key, input_size, hidden_size, output_size, dtype=jnp.float32):
    """Deterministic PyTorch-style (uniform +-1/sqrt(fan_in)) init; weights stored [in, out]."""
    k1, k2, k3, k4 = jax.random.split(key, 4)
    lim1 = 1.0 / jnp.sqrt(jnp.asarray(input_size, jnp.float32))
    lim2 = 1.0 / jnp.sqrt(jnp.asarray(hidden_size, jnp.float32))
    w1 = jax.random.uniform(k1, (input_size, hidden_size), dtype, -lim1, lim1)
    b1 = jax.random.uniform(k2, (hidden_size,), jnp.float32, -lim1, lim1)
    w2 = jax.random.uniform(k3, (hidden_size, output_size), dtype, -lim2, lim2)
    b2 = jax.random.uniform(k4, (output_size,), jnp.float32, -lim2, lim2)
    return w1, b1, w2, b2


if __name__ == "__main__":
    key = jax.random.PRNGKey(0)
    kx, kp, kx2, kp2 = jax.random.split(key, 4)

    # --- Small case matching the module's toy sizes (exercises the lane-padding path). ---
    n_relations, input_size, hidden_size, output_size = 8, 16, 32, 32
    x = jax.random.normal(kx, (n_relations, input_size), jnp.float32)
    w1, b1, w2, b2 = init_params(kp, input_size, hidden_size, output_size)

    out = jax.block_until_ready(relation_encoder(x, w1, b1, w2, b2))
    ref = jnp.maximum(jnp.maximum(x @ w1 + b1, 0.0) @ w2 + b2, 0.0)
    assert out.shape == (n_relations, output_size)
    assert jnp.allclose(out, ref, atol=1e-5, rtol=1e-5)

    # --- bf16 weights/activations (recommended on v6e/v7x); f32 accumulation in-kernel. ---
    out_bf16 = jax.block_until_ready(
        relation_encoder(x.astype(jnp.bfloat16), w1.astype(jnp.bfloat16), b1,
                         w2.astype(jnp.bfloat16), b2))
    assert out_bf16.shape == (n_relations, output_size)
    assert out_bf16.dtype == jnp.bfloat16
    assert jnp.allclose(out_bf16.astype(jnp.float32), ref, atol=7.5e-2, rtol=7.5e-2)

    # --- Moderate, already lane-aligned case: multi-step "parallel" grid (2-TC shard on v7x). ---
    n2, d_in2, hid2, d_out2 = 1024, 128, 256, 128
    x2 = jax.random.normal(kx2, (n2, d_in2), jnp.float32)
    p2 = init_params(kp2, d_in2, hid2, d_out2)
    out2 = jax.block_until_ready(relation_encoder(x2, *p2, row_tile=512))
    hi = jax.lax.Precision.HIGHEST
    h2 = jnp.maximum(jnp.dot(x2, p2[0], precision=hi) + p2[1], 0.0)
    ref2 = jnp.maximum(jnp.dot(h2, p2[2], precision=hi) + p2[3], 0.0)
    assert out2.shape == (n2, d_out2)
    assert jnp.allclose(out2, ref2, atol=2e-3, rtol=2e-3)

    print("KERNEL_OK")
</pallas_src>

<mosaic_0001>
module attributes {stable_mosaic.version = 11 : i64} {
  func.func @relation_encoder_kernel(%arg0: i32, %arg1: memref<8x128xf32, #tpu.memory_space<vmem>>, %arg2: memref<128x128xf32, #tpu.memory_space<vmem>>, %arg3: memref<1x128xf32, #tpu.memory_space<vmem>>, %arg4: memref<128x128xf32, #tpu.memory_space<vmem>>, %arg5: memref<1x128xf32, #tpu.memory_space<vmem>>, %arg6: memref<8x128xf32, #tpu.memory_space<vmem>>) attributes {dimension_semantics = [#tpu.dimension_semantics<parallel>], iteration_bounds = array<i64: 1>, scalar_prefetch = 0 : i64, scratch_operands = 0 : i64, tpu.core_type = #tpu.core_type<tc>, window_params = [{transform_indices = @transform_0, window_bounds = array<i64: 8, 128>}, {pipeline_mode = #tpu.pipeline_mode<synchronous>, transform_indices = @transform_1, window_bounds = array<i64: 128, 128>}, {pipeline_mode = #tpu.pipeline_mode<synchronous>, transform_indices = @transform_2, window_bounds = array<i64: 1, 128>}, {pipeline_mode = #tpu.pipeline_mode<synchronous>, transform_indices = @transform_3, window_bounds = array<i64: 128, 128>}, {pipeline_mode = #tpu.pipeline_mode<synchronous>, transform_indices = @transform_4, window_bounds = array<i64: 1, 128>}, {transform_indices = @transform_5, window_bounds = array<i64: 8, 128>}]} {
    %c0 = arith.constant 0 : index
    %c0_0 = arith.constant 0 : index
    %0 = vector.load %arg1[%c0, %c0_0] : memref<8x128xf32, #tpu.memory_space<vmem>>, vector<8x128xf32>
    %c0_1 = arith.constant 0 : index
    %c0_2 = arith.constant 0 : index
    %1 = vector.load %arg2[%c0_1, %c0_2] : memref<128x128xf32, #tpu.memory_space<vmem>>, vector<128x128xf32>
    %cst = arith.constant dense<0.000000e+00> : vector<8x128xf32>
    %2 = tpu.matmul %0, %1, %cst {dimension_numbers = #tpu.dot_dimension_numbers<[1], [0], [0], [1], [0, 0, 1, 1], [], []>} : vector<8x128xf32>, vector<128x128xf32>, vector<8x128xf32> -> vector<8x128xf32>
    %c0_3 = arith.constant 0 : index
    %c0_4 = arith.constant 0 : index
    %3 = vector.load %arg3[%c0_3, %c0_4] : memref<1x128xf32, #tpu.memory_space<vmem>>, vector<1x128xf32>
    %4 = vector.broadcast %3 : vector<1x128xf32> to vector<8x128xf32>
    %5 = arith.addf %2, %4 : vector<8x128xf32>
    %cst_5 = arith.constant 0.000000e+00 : f32
    %6 = vector.broadcast %cst_5 : f32 to vector<8x128xf32>
    %7 = arith.maximumf %5, %6 : vector<8x128xf32>
    %c0_6 = arith.constant 0 : index
    %c0_7 = arith.constant 0 : index
    %8 = vector.load %arg4[%c0_6, %c0_7] : memref<128x128xf32, #tpu.memory_space<vmem>>, vector<128x128xf32>
    %cst_8 = arith.constant dense<0.000000e+00> : vector<8x128xf32>
    %9 = tpu.matmul %7, %8, %cst_8 {dimension_numbers = #tpu.dot_dimension_numbers<[1], [0], [0], [1], [0, 0, 1, 1], [], []>} : vector<8x128xf32>, vector<128x128xf32>, vector<8x128xf32> -> vector<8x128xf32>
    %c0_9 = arith.constant 0 : index
    %c0_10 = arith.constant 0 : index
    %10 = vector.load %arg5[%c0_9, %c0_10] : memref<1x128xf32, #tpu.memory_space<vmem>>, vector<1x128xf32>
    %11 = vector.broadcast %10 : vector<1x128xf32> to vector<8x128xf32>
    %12 = arith.addf %9, %11 : vector<8x128xf32>
    %cst_11 = arith.constant 0.000000e+00 : f32
    %13 = vector.broadcast %cst_11 : f32 to vector<8x128xf32>
    %14 = arith.maximumf %12, %13 : vector<8x128xf32>
    %c0_12 = arith.constant 0 : index
    %c0_13 = arith.constant 0 : index
    %15 = vector.load %arg6[%c0_12, %c0_13] : memref<8x128xf32, #tpu.memory_space<vmem>>, vector<8x128xf32>
    tpu.vector_store %arg6[%c0_12, %c0_13], %14 {strides = array<i32>} : memref<8x128xf32, #tpu.memory_space<vmem>>, vector<8x128xf32>,
    return
  }
  func.func @transform_0(%arg0: i32) -> (i32, i32) {
    %c0_i32 = arith.constant 0 : i32
    %c0_i32_0 = arith.constant 0 : i32
    return %arg0, %c0_i32 : i32, i32
  }
  func.func @transform_1(%arg0: i32) -> (i32, i32) {
    %c0_i32 = arith.constant 0 : i32
    %c0_i32_0 = arith.constant 0 : i32
    %c0_i32_1 = arith.constant 0 : i32
    return %c0_i32, %c0_i32_0 : i32, i32
  }
  func.func @transform_2(%arg0: i32) -> (i32, i32) {
    %c0_i32 = arith.constant 0 : i32
    %c0_i32_0 = arith.constant 0 : i32
    %c0_i32_1 = arith.constant 0 : i32
    return %c0_i32, %c0_i32_0 : i32, i32
  }
  func.func @transform_3(%arg0: i32) -> (i32, i32) {
    %c0_i32 = arith.constant 0 : i32
    %c0_i32_0 = arith.constant 0 : i32
    %c0_i32_1 = arith.constant 0 : i32
    return %c0_i32, %c0_i32_0 : i32, i32
  }
  func.func @transform_4(%arg0: i32) -> (i32, i32) {
    %c0_i32 = arith.constant 0 : i32
    %c0_i32_0 = arith.constant 0 : i32
    %c0_i32_1 = arith.constant 0 : i32
    return %c0_i32, %c0_i32_0 : i32, i32
  }
  func.func @transform_5(%arg0: i32) -> (i32, i32) {
    %c0_i32 = arith.constant 0 : i32
    %c0_i32_0 = arith.constant 0 : i32
    return %arg0, %c0_i32 : i32, i32
  }
}

</mosaic_0001>

<llo_original>
// kernel: tpu_custom_call.1
$region0: #{tpu_custom_call.1}
  #allocation0 [shape = 'u32[]', space=smem, size = 0x4, offset = 0x4, fixed_abs, tag = 'smem constant byte address 0x4 - core index']
  #allocation1 [shape = 'u32[72,128]{1,0:T(1,128)}', space=vmem, size = 0x9000, scoped, tag = 'internal scratch']
  %s0 = inlined_call_operand.hbm [shape: f32[8,128], index: 0, kind: input, shape index: {}]
  %s1 = inlined_call_operand.hbm [shape: f32[128,128], index: 1, kind: input, shape index: {}]
  %s2 = inlined_call_operand.vmem [shape: f32[1,128], index: 2, kind: input, shape index: {}]
  %s3 = inlined_call_operand.hbm [shape: f32[128,128], index: 3, kind: input, shape index: {}]
  %s4 = inlined_call_operand.vmem [shape: f32[1,128], index: 4, kind: input, shape index: {}]
  %s5 = inlined_call_operand.hbm [shape: f32[8,128], index: 5, kind: output, shape index: {}]
  %s6 = sld [smem:[#allocation0]]
  $region42: #{tpu_custom_call.1} parent=0
    _
  %s8 = ssub.s32 1, %s6
  %s9 = scalar_select 0, %s8, %s6
  $region1: #{tpu_custom_call.1} parent=0
    #allocation2 [shape = 'u8[4096]{0}', space=vmem, size = 0x1000, scoped, tag = 'input window, operand 0, single buffered']
    #allocation3 [shape = 's32[1]{0}', space=sflag, size = 0x4, scoped, tag = 'scoped memory for tpu_custom_call.1']
    #allocation4 [shape = 's32[1]{0}', space=sflag, size = 0x4, scoped, tag = 'scoped memory for tpu_custom_call.1']
    #allocation5 [shape = 'u8[65536]{0}', space=vmem, size = 0x10000, scoped, tag = 'input window, operand 1, single buffered']
    #allocation6 [shape = 's32[1]{0}', space=sflag, size = 0x4, scoped, tag = 'scoped memory for tpu_custom_call.1']
    #allocation7 [shape = 'u8[65536]{0}', space=vmem, size = 0x10000, scoped, tag = 'input window, operand 3, single buffered']
    #allocation8 [shape = 'u8[4096]{0}', space=vmem, size = 0x1000, scoped, tag = 'output window, operand 0, single buffered']
    %10 = vsyncpa [#allocation3], 0
    %11 = vsyncpa [#allocation6], 0
    %12 = vsyncpa [#allocation4], 0
    // Predicated region
    $region2: #{tpu_custom_call.1} parent=1 // pred_check
      _
    $region3: #{tpu_custom_call.1} parent=1 // pred_check_branch
      %14 = sbr.rel (0) target = $region5
    $region4: #{tpu_custom_call.1} parent=1 // pred_region
      %16 = vsyncadd [#allocation3], 0
      %s18 = sshll.u32 %s0, 4
      %s19 = int_to_ptr.hbm [resolvable:$true] %s18
      %s20 = sshll.u32 [#allocation2], 4
      %s21 = int_to_ptr.vmem [resolvable:$true] %s20
      %23 = dma.hbm_to_vmem [thread:$0]  %s19, 128, %s21, [#allocation3]
    $region5: #{tpu_custom_call.1} parent=1 // pred_fallthru
      _
    // Predicated region
    $region6: #{tpu_custom_call.1} parent=1 // pred_check
      _
    $region7: #{tpu_custom_call.1} parent=1 // pred_check_branch
      %25 = sbr.rel (0) target = $region9
    $region8: #{tpu_custom_call.1} parent=1 // pred_region
      %27 = vsyncadd [#allocation6], 0
      %s28 = sshll.u32 %s1, 4
      %s29 = int_to_ptr.hbm [resolvable:$true] %s28
      %s30 = sshll.u32 [#allocation5], 4
      %s31 = int_to_ptr.vmem [resolvable:$true] %s30
      %36 = dma.hbm_to_vmem [thread:$0]  %s29, 2048, %s31, [#allocation6], 128, 128, 8
    $region9: #{tpu_custom_call.1} parent=1 // pred_fallthru
      _
    // Predicated region
    $region10: #{tpu_custom_call.1} parent=1 // pred_check
      _
    $region11: #{tpu_custom_call.1} parent=1 // pred_check_branch
      %38 = sbr.rel (0) target = $region13
    $region12: #{tpu_custom_call.1} parent=1 // pred_region
      _
    $region13: #{tpu_custom_call.1} parent=1 // pred_fallthru
      _
    // Predicated region
    $region14: #{tpu_custom_call.1} parent=1 // pred_check
      _
    $region15: #{tpu_custom_call.1} parent=1 // pred_check_branch
      %40 = sbr.rel (0) target = $region17
    $region16: #{tpu_custom_call.1} parent=1 // pred_region
      %42 = vsyncadd [#allocation6], 0
      %s43 = sshll.u32 %s3, 4
      %s44 = int_to_ptr.hbm [resolvable:$true] %s43
      %s45 = sshll.u32 [#allocation7], 4
      %s46 = int_to_ptr.vmem [resolvable:$true] %s45
      %51 = dma.hbm_to_vmem [thread:$0]  %s44, 2048, %s46, [#allocation6], 128, 128, 8
    $region17: #{tpu_custom_call.1} parent=1 // pred_fallthru
      _
    // Predicated region
    $region18: #{tpu_custom_call.1} parent=1 // pred_check
      _
    $region19: #{tpu_custom_call.1} parent=1 // pred_check_branch
      %53 = sbr.rel (0) target = $region21
    $region20: #{tpu_custom_call.1} parent=1 // pred_region
      _
    $region21: #{tpu_custom_call.1} parent=1 // pred_fallthru
      _
    // Predicated region
    $region22: #{tpu_custom_call.1} parent=1 // pred_check
      _
    $region23: #{tpu_custom_call.1} parent=1 // pred_check_branch
      %55 = sbr.rel (0) target = $region25
    $region24: #{tpu_custom_call.1} parent=1 // pred_region
      %57 = dma.done [#allocation3], 128
    $region25: #{tpu_custom_call.1} parent=1 // pred_fallthru
      _
    // Predicated region
    $region26: #{tpu_custom_call.1} parent=1 // pred_check
      _
    $region27: #{tpu_custom_call.1} parent=1 // pred_check_branch
      %59 = sbr.rel (0) target = $region29
    $region28: #{tpu_custom_call.1} parent=1 // pred_region
      %61 = dma.done [#allocation6], 2048
    $region29: #{tpu_custom_call.1} parent=1 // pred_fallthru
      _
    // Predicated region
    $region30: #{tpu_custom_call.1} parent=1 // pred_check
      _
    $region31: #{tpu_custom_call.1} parent=1 // pred_check_branch
      %63 = sbr.rel (0) target = $region33
    $region32: #{tpu_custom_call.1} parent=1 // pred_region
      %65 = dma.done [#allocation6], 2048
    $region33: #{tpu_custom_call.1} parent=1 // pred_fallthru
      _
    %v66 = vld [vmem:[#allocation2] sm:$0xff]
    %v67 = vld [vmem:[#allocation5] sm:$0xff]
    %v68 = vld [vmem:[#allocation5 + $0x8] sm:$0xff]
    %v69 = vld [vmem:[#allocation5 + $0x10] sm:$0xff]
    %v70 = vld [vmem:[#allocation5 + $0x18] sm:$0xff]
    %v71 = vld [vmem:[#allocation5 + $0x20] sm:$0xff]
    %v72 = vld [vmem:[#allocation5 + $0x28] sm:$0xff]
    %v73 = vld [vmem:[#allocation5 + $0x30] sm:$0xff]
    %v74 = vld [vmem:[#allocation5 + $0x38] sm:$0xff]
    %v75 = vld [vmem:[#allocation5 + $0x40] sm:$0xff]
    %v76 = vld [vmem:[#allocation5 + $0x48] sm:$0xff]
    %v77 = vld [vmem:[#allocation5 + $0x50] sm:$0xff]
    %v78 = vld [vmem:[#allocation5 + $0x58] sm:$0xff]
    %v79 = vld [vmem:[#allocation5 + $0x60] sm:$0xff]
    %v80 = vld [vmem:[#allocation5 + $0x68] sm:$0xff]
    %v81 = vld [vmem:[#allocation5 + $0x70] sm:$0xff]
    %v82 = vld [vmem:[#allocation5 + $0x78] sm:$0xff]
    %v83 = vld [vmem:[%s2] sm:$0x1]
    %v85 = vperm.slane %v83, 0
    %87 = vmatpush.msra.mxu0 %v82
    %88 = vmatpush.msra.mxu0 %v81
    %89 = vmatpush.msra.mxu0 %v80
    %90 = vmatpush.msra.mxu0 %v79
    %91 = vmatpush.msra.mxu0 %v78
    %92 = vmatpush.msra.mxu0 %v77
    %93 = vmatpush.msra.mxu0 %v76
    %94 = vmatpush.msra.mxu0 %v75
    %95 = vmatpush.msra.mxu0 %v74
    %96 = vmatpush.msra.mxu0 %v73
    %97 = vmatpush.msra.mxu0 %v72
    %98 = vmatpush.msra.mxu0 %v71
    %99 = vmatpush.msra.mxu0 %v70
    %100 = vmatpush.msra.mxu0 %v69
    %101 = vmatpush.msra.mxu0 %v68
    %102 = vmatpush.msra.mxu0 %v67
    %103 = vmatmul.f32.gmra.mxu0 %v66
    %v104 = vpop.f32.mrf.mxu0
    %v105 = vadd.f32 %v85, %v104
    %106 = vdwg.mxu0
    %v107 = vmax.f32 %v105, 0.0
    %v108 = vld [vmem:[#allocation7] sm:$0xff]
    %v109 = vld [vmem:[#allocation7 + $0x8] sm:$0xff]
    %v110 = vld [vmem:[#allocation7 + $0x10] sm:$0xff]
    %v111 = vld [vmem:[#allocation7 + $0x18] sm:$0xff]
    %v112 = vld [vmem:[#allocation7 + $0x20] sm:$0xff]
    %v113 = vld [vmem:[#allocation7 + $0x28] sm:$0xff]
    %v114 = vld [vmem:[#allocation7 + $0x30] sm:$0xff]
    %v115 = vld [vmem:[#allocation7 + $0x38] sm:$0xff]
    %v116 = vld [vmem:[#allocation7 + $0x40] sm:$0xff]
    %v117 = vld [vmem:[#allocation7 + $0x48] sm:$0xff]
    %v118 = vld [vmem:[#allocation7 + $0x50] sm:$0xff]
    %v119 = vld [vmem:[#allocation7 + $0x58] sm:$0xff]
    %v120 = vld [vmem:[#allocation7 + $0x60] sm:$0xff]
    %v121 = vld [vmem:[#allocation7 + $0x68] sm:$0xff]
    %v122 = vld [vmem:[#allocation7 + $0x70] sm:$0xff]
    %v123 = vld [vmem:[#allocation7 + $0x78] sm:$0xff]
    %v124 = vld [vmem:[%s4] sm:$0x1]
    %v126 = vperm.slane %v124, 0
    %128 = vmatpush.msra.mxu0 %v123
    %129 = vmatpush.msra.mxu0 %v122
    %130 = vmatpush.msra.mxu0 %v121
    %131 = vmatpush.msra.mxu0 %v120
    %132 = vmatpush.msra.mxu0 %v119
    %133 = vmatpush.msra.mxu0 %v118
    %134 = vmatpush.msra.mxu0 %v117
    %135 = vmatpush.msra.mxu0 %v116
    %136 = vmatpush.msra.mxu0 %v115
    %137 = vmatpush.msra.mxu0 %v114
    %138 = vmatpush.msra.mxu0 %v113
    %139 = vmatpush.msra.mxu0 %v112
    %140 = vmatpush.msra.mxu0 %v111
    %141 = vmatpush.msra.mxu0 %v110
    %142 = vmatpush.msra.mxu0 %v109
    %143 = vmatpush.msra.mxu0 %v108
    %144 = vmatmul.f32.gmra.mxu0 %v107
    %v145 = vpop.f32.mrf.mxu0
    %v146 = vadd.f32 %v126, %v145
    %147 = vdwg.mxu0
    %v148 = vmax.f32 %v146, 0.0
    %149 = vst [vmem:[#allocation8] sm:$0xff] %v148
    // Predicated region
    $region34: #{tpu_custom_call.1} parent=1 // pred_check
      _
    $region35: #{tpu_custom_call.1} parent=1 // pred_check_branch
      %151 = sbr.rel (0) target = $region37
    $region36: #{tpu_custom_call.1} parent=1 // pred_region
      %153 = vsyncadd [#allocation4], 0
      %s155 = sshll.u32 [#allocation8], 4
      %s156 = int_to_ptr.vmem [resolvable:$true] %s155
      %s157 = sshll.u32 %s5, 4
      %s158 = int_to_ptr.hbm [resolvable:$true] %s157
      %160 = dma.vmem_to_hbm [thread:$0]  %s156, 128, %s158, [#allocation4]
    $region37: #{tpu_custom_call.1} parent=1 // pred_fallthru
      _
    // Predicated region
    $region38: #{tpu_custom_call.1} parent=1 // pred_check
      _
    $region39: #{tpu_custom_call.1} parent=1 // pred_check_branch
      %162 = sbr.rel (0) target = $region41
    $region40: #{tpu_custom_call.1} parent=1 // pred_region
      %164 = dma.done [#allocation4], 128
    $region41: #{tpu_custom_call.1} parent=1 // pred_fallthru
      _
    %165 = vsyncpa [#allocation3], 1
    %166 = vsyncpa [#allocation6], 1
    %167 = vsyncpa [#allocation4], 1

</llo_original>
